<compile_context>
chip_gen: v7x
topology: tpu7x:2x2x1
jax: 0.10.0
libtpu: 0.0.40
codegen_flags: <defaults>
</compile_context>

<pallas_src>
import numpy as np
import jax
import jax.numpy as jnp
from jax.experimental import pallas as pl
from jax.experimental.pallas import tpu as pltpu


# --------------------------- db4 DWT operator construction (setup glue) ----------------

_DB4_H = np.array([
    0.23037781330885523, 0.7148465705525415, 0.6308807679295904,
    -0.02798376941698385, -0.18703481171888114, 0.030841381835986965,
    0.032883011666982945, -0.010597401784997278], dtype=np.float64)
_DEC_LO = _DB4_H[::-1].copy()                                          # pywt dec_lo
_DEC_HI = np.array([(-1.0) ** (n + 1) * _DB4_H[n] for n in range(8)])  # pywt dec_hi


def _sym_index(p, n):
    # pywt 'symmetric' (half-sample) boundary extension index mapping.
    while p < 0 or p >= n:
        if p < 0:
            p = -p - 1
        if p >= n:
            p = 2 * n - 1 - p
    return p


def _dwt_step_matrix(n, filt):
    # Matrix form of one pywt downsampling convolution: out[o] = sum_j filt[j]*X(2o+1-j).
    f = len(filt)
    m = (n + f - 1) // 2
    mat = np.zeros((m, n), dtype=np.float64)
    for o in range(m):
        for j in range(f):
            mat[o, _sym_index(2 * o + 1 - j, n)] += filt[j]
    return mat


def build_wavelet_bands(L, levels):
    """Returns the per-band coefficient operators in pywt order [cA_L, cD_L, ..., cD_1]."""
    A = np.eye(L)
    details = []
    n = L
    for _ in range(levels):
        lo = _dwt_step_matrix(n, _DEC_LO)
        hi = _dwt_step_matrix(n, _DEC_HI)
        details.append(hi @ A)       # detail coefficients of this level as a map from x
        A = lo @ A                   # approximation cascade
        n = lo.shape[0]
    return [A] + details[::-1]


# ------------------------------------ Pallas kernel ------------------------------------

def _wavelet_mlp_kernel(x_ref, tt_ref, fused_ref, w1b_ref, b1_ref, w2p_ref, b2p_ref,
                        o_ref):
    nbands, d = w1b_ref.shape                            # static: (levels, d_model)

    # (TB, L) bf16 @ (L, Kp) bf16 -> f32 wavelet coefficients (bands packed along lanes).
    x = x_ref[...].astype(tt_ref.dtype)
    c = jnp.dot(x, tt_ref[...], preferred_element_type=jnp.float32)       # (TB, Kp)

    # One fused lane-dense MXU push replacing three narrow matmuls:
    #   cols [0:D]          = (sel @ w1a) applied to |c|   (mean|c| branch of Linear1)
    #   cols [D:D+NB]       = sel applied to c             (per-band mean)
    #   cols [D+NB:D+2NB]   = sel applied to c^2           (per-band mean of squares)
    # Kept f32 so the E[c^2]-E[c]^2 std path does not suffer bf16 cancellation.
    lhs = jnp.concatenate([jnp.abs(c), c, c * c], axis=1)                  # (TB, 3Kp)
    s = jnp.dot(lhs, fused_ref[...], preferred_element_type=jnp.float32)  # (TB, SP)

    habs = s[:, :d]                                                        # (TB, D)
    mean = s[:, d:d + nbands]                                              # (TB, NB)
    msq = s[:, d + nbands:d + 2 * nbands]                                  # (TB, NB)
    std = jnp.sqrt(jnp.maximum(msq - mean * mean, 0.0))   # population std (np.std)

    # Linear(levels*2, d_model) on interleaved [mean|c|_b, std_b] features (mean-abs
    # branch already folded into the fused matmul above) -> ReLU -> Linear(D, Dp).
    h = jnp.maximum(
        habs
        + jnp.dot(std.astype(w1b_ref.dtype), w1b_ref[...],
                  preferred_element_type=jnp.float32)
        + b1_ref[...], 0.0)                                                # (TB, D)
    y = jnp.dot(h.astype(w2p_ref.dtype), w2p_ref[...],
                preferred_element_type=jnp.float32) + b2p_ref[...]         # (TB, Dp)
    o_ref[...] = y                                       # lane-dense 128-wide store


def _pick_batch_tile(B, L, x_itemsize):
    """Batch tile: big enough to amortize per-grid-step overhead, small enough to keep
    the double-buffered x/out tiles within an explicit VMEM budget (64 MiB v7x part),
    and <= ceil(B/2) so the 'parallel' axis has >= 2 steps for both v7x TensorCores."""
    if B <= 16:
        return B                                          # single full block
    budget = 8 << 20                                      # x + out double-buffer budget
    per_row = 2 * (L * x_itemsize + 128 * 4)
    tb = min(1024, B, max(16, budget // max(per_row, 1)))
    tb = min(tb, -(-B // 2))                              # >= 2 grid steps
    return max(16, (tb // 16) * 16)
    # TODO(synk): for very large L the resident (L, Kp) operator itself outgrows VMEM;
    # that regime needs an extra "arbitrary" L-tiled reduction axis with a coeff
    # accumulator, not just a smaller batch tile.


def wavelet_feature_extractor(x, params):
    B, L = x.shape
    Tt, fused, w1b, b1, w2p, b2p = params
    Kp = Tt.shape[1]
    SP = fused.shape[1]
    NB, D = w1b.shape
    Dp = w2p.shape[1]
    TB = _pick_batch_tile(B, L, x.dtype.itemsize)
    nsteps = pl.cdiv(B, TB)

    flops = 2 * B * (L * Kp + 3 * Kp * SP + NB * D + D * Dp)
    bytes_accessed = int(x.size) * x.dtype.itemsize \
        + sum(int(p.size) * p.dtype.itemsize for p in params) + B * Dp * 4
    cost = pl.CostEstimate(flops=int(flops), transcendentals=int(B * NB),
                           bytes_accessed=int(bytes_accessed))

    resident = sum(int(p.size) * p.dtype.itemsize for p in params)
    tiles = 2 * TB * L * x.dtype.itemsize + 2 * TB * Dp * 4   # double-buffered x / out
    interm = TB * (Kp + 3 * Kp + SP + Dp) * 4                 # in-kernel f32 temporaries
    vmem_limit = int(min(32 << 20, max(16 << 20, 2 * (resident + tiles + interm))))

    out = pl.pallas_call(
        _wavelet_mlp_kernel,
        out_shape=jax.ShapeDtypeStruct((B, Dp), jnp.float32),
        grid=(nsteps,),
        in_specs=[
            pl.BlockSpec((TB, L), lambda i: (i, 0)),      # x tile (pipelined over batch)
            pl.BlockSpec((L, Kp), lambda i: (0, 0)),      # bf16 wavelet operator (resident)
            pl.BlockSpec((3 * Kp, SP), lambda i: (0, 0)),  # fused stats/abs RHS (f32)
            pl.BlockSpec((NB, D), lambda i: (0, 0)),      # w1b (std branch, bf16)
            pl.BlockSpec((1, D), lambda i: (0, 0)),       # b1
            pl.BlockSpec((D, Dp), lambda i: (0, 0)),      # w2 padded to 128 lanes (bf16)
            pl.BlockSpec((1, Dp), lambda i: (0, 0)),      # b2 padded
        ],
        out_specs=pl.BlockSpec((TB, Dp), lambda i: (i, 0)),
        compiler_params=pltpu.CompilerParams(
            dimension_semantics=("parallel",),            # megacore-shardable batch axis
            vmem_limit_bytes=vmem_limit),
        cost_estimate=cost,
    )(x, Tt, fused, w1b, b1, w2p, b2p)

    # unsqueeze(-1).expand(-1, -1, L): every value along L is identical, so the expand
    # stays outside the kernel as a cheap XLA broadcast.
    # TODO(synk): if a consumer forces a contiguous (B, D, L) layout, XLA materializes
    # this broadcast and re-introduces the B*D*L*4 HBM write the kernel avoids.
    y = out[:, :D]
    return jnp.broadcast_to(y[:, :, None], (B, D, L))


# --------------------------------- parameter setup (glue) ------------------------------

def make_params(L, d_model=32, levels=4, key=jax.random.PRNGKey(0)):
    bands = build_wavelet_bands(L, levels)     # pywt order [cA_L, cD_L, ..., cD_1]
    used = bands[:levels]                      # keep first `levels` bands (see TODO above)
    lens = [b.shape[0] for b in used]
    K = sum(lens)
    Kp = ((K + 127) // 128) * 128

    T = np.zeros((Kp, L), dtype=np.float64)
    T[:K] = np.concatenate(used, axis=0)
    sel = np.zeros((Kp, levels), dtype=np.float64)
    off = 0
    for b, ln in enumerate(lens):
        sel[off:off + ln, b] = 1.0 / ln
        off += ln

    NB, D = levels, d_model
    Dp = ((D + 127) // 128) * 128                         # lane-dense output width
    SP = ((D + 2 * NB + 127) // 128) * 128                # fused-matmul output width

    # Deterministic synthetic weights for coeff_analyzer = Linear(2*levels, D) -> ReLU
    # -> Linear(D, D).  Feature order is the interleaved [mean|c|_b, std_b] of the spec.
    k1, k2, k3, k4 = jax.random.split(key, 4)
    w1 = np.asarray(jax.random.normal(k1, (2 * levels, D), jnp.float32), np.float64) * 0.1
    b1 = np.asarray(jax.random.normal(k2, (D,), jnp.float32), np.float64) * 0.1
    w2 = np.asarray(jax.random.normal(k3, (D, D), jnp.float32), np.float64) * 0.1
    b2 = np.asarray(jax.random.normal(k4, (D,), jnp.float32), np.float64) * 0.1

    w1a = w1[0::2]                       # (levels, D): weights for mean|c| features
    w1b = w1[1::2]                       # (levels, D): weights for std features
    w1a_folded = sel @ w1a               # (Kp, D): band-mean selector folded into Linear1

    # Block-diagonal RHS of the single fused stats/abs matmul.
    fused = np.zeros((3 * Kp, SP), dtype=np.float32)
    fused[0:Kp, 0:D] = w1a_folded
    fused[Kp:2 * Kp, D:D + NB] = sel
    fused[2 * Kp:3 * Kp, D + NB:D + 2 * NB] = sel

    w2p = np.zeros((D, Dp), dtype=np.float32)
    w2p[:, :D] = w2
    b2p = np.zeros((1, Dp), dtype=np.float32)
    b2p[0, :D] = b2

    kernel_params = (
        jnp.asarray(T.T, jnp.bfloat16),              # (L, Kp)  wavelet operator
        jnp.asarray(fused, jnp.float32),             # (3Kp, SP) fused stats/abs RHS
        jnp.asarray(w1b, jnp.bfloat16),              # (NB, D)
        jnp.asarray(b1.reshape(1, D), jnp.float32),  # (1, D)
        jnp.asarray(w2p, jnp.bfloat16),              # (D, Dp)
        jnp.asarray(b2p, jnp.float32),               # (1, Dp)
    )
    ref_params = dict(bands=used, w1=w1, b1=b1, w2=w2, b2=b2)
    return kernel_params, ref_params


def _reference_f64(x, ref_params):
    """Float64 numpy reference of the original module's forward (unfolded, unpadded)."""
    xs = np.asarray(x, np.float64)
    B, L = xs.shape
    feats = []
    for i in range(B):
        row = []
        for band in ref_params["bands"]:
            c = band @ xs[i]
            row.extend([np.mean(np.abs(c)), np.std(c)])   # np.std = population std
        feats.append(row)
    f = np.asarray(feats)                                  # (B, 2*levels)
    h = np.maximum(f @ ref_params["w1"] + ref_params["b1"], 0.0)
    y = h @ ref_params["w2"] + ref_params["b2"]            # (B, D)
    return np.broadcast_to(y[:, :, None], (B, y.shape[1], L))


# --------------------------------------- main ------------------------------------------

if __name__ == "__main__":
    B, L, d_model, levels = 2, 128, 32, 4
    key = jax.random.PRNGKey(0)
    kx, kp = jax.random.split(key)
    # x arrives in bf16 at the pallas_call boundary (producer-side dtype): halves the
    # dominant HBM read and the double-buffered VMEM x tile.
    x = jax.random.normal(kx, (B, L), dtype=jnp.float32).astype(jnp.bfloat16)
    params, ref_params = make_params(L, d_model=d_model, levels=levels, key=kp)

    y = jax.block_until_ready(wavelet_feature_extractor(x, params))
    assert y.shape == (B, d_model, L) and y.dtype == jnp.float32

    ref = _reference_f64(x, ref_params)
    err = float(np.max(np.abs(np.asarray(y, np.float64) - ref)))
    assert np.allclose(np.asarray(y, np.float64), ref, rtol=2e-2, atol=2e-2), err

    print("KERNEL_OK")
</pallas_src>

<mosaic_0001>
module attributes {stable_mosaic.version = 11 : i64} {
  func.func @_wavelet_mlp_kernel(%arg0: i32, %arg1: memref<2x128xbf16, #tpu.memory_space<vmem>>, %arg2: memref<128x128xbf16, #tpu.memory_space<vmem>>, %arg3: memref<384x128xf32, #tpu.memory_space<vmem>>, %arg4: memref<4x32xbf16, #tpu.memory_space<vmem>>, %arg5: memref<1x32xf32, #tpu.memory_space<vmem>>, %arg6: memref<32x128xbf16, #tpu.memory_space<vmem>>, %arg7: memref<1x128xf32, #tpu.memory_space<vmem>>, %arg8: memref<2x128xf32, #tpu.memory_space<vmem>>) attributes {dimension_semantics = [#tpu.dimension_semantics<parallel>], iteration_bounds = array<i64: 1>, scalar_prefetch = 0 : i64, scratch_operands = 0 : i64, tpu.core_type = #tpu.core_type<tc>, window_params = [{transform_indices = @transform_0, window_bounds = array<i64: 2, 128>}, {pipeline_mode = #tpu.pipeline_mode<synchronous>, transform_indices = @transform_1, window_bounds = array<i64: 128, 128>}, {pipeline_mode = #tpu.pipeline_mode<synchronous>, transform_indices = @transform_2, window_bounds = array<i64: 384, 128>}, {pipeline_mode = #tpu.pipeline_mode<synchronous>, transform_indices = @transform_3, window_bounds = array<i64: 4, 32>}, {pipeline_mode = #tpu.pipeline_mode<synchronous>, transform_indices = @transform_4, window_bounds = array<i64: 1, 32>}, {pipeline_mode = #tpu.pipeline_mode<synchronous>, transform_indices = @transform_5, window_bounds = array<i64: 32, 128>}, {pipeline_mode = #tpu.pipeline_mode<synchronous>, transform_indices = @transform_6, window_bounds = array<i64: 1, 128>}, {transform_indices = @transform_7, window_bounds = array<i64: 2, 128>}]} {
    %c0 = arith.constant 0 : index
    %c0_0 = arith.constant 0 : index
    %0 = vector.load %arg1[%c0, %c0_0] : memref<2x128xbf16, #tpu.memory_space<vmem>>, vector<2x128xbf16>
    %c0_1 = arith.constant 0 : index
    %c0_2 = arith.constant 0 : index
    %1 = vector.load %arg2[%c0_1, %c0_2] : memref<128x128xbf16, #tpu.memory_space<vmem>>, vector<128x128xbf16>
    %cst = arith.constant dense<0.000000e+00> : vector<2x128xf32>
    %2 = tpu.matmul %0, %1, %cst {dimension_numbers = #tpu.dot_dimension_numbers<[1], [0], [0], [1], [0, 0, 1, 1], [], []>} : vector<2x128xbf16>, vector<128x128xbf16>, vector<2x128xf32> -> vector<2x128xf32>
    %3 = math.absf %2 : vector<2x128xf32>
    %4 = arith.mulf %2, %2 : vector<2x128xf32>
    %5 = tpu.concatenate %3, %2, %4 in 1 : vector<2x128xf32>, vector<2x128xf32>, vector<2x128xf32> -> vector<2x384xf32>
    %c0_3 = arith.constant 0 : index
    %c0_4 = arith.constant 0 : index
    %6 = vector.load %arg3[%c0_3, %c0_4] : memref<384x128xf32, #tpu.memory_space<vmem>>, vector<384x128xf32>
    %cst_5 = arith.constant dense<0.000000e+00> : vector<2x128xf32>
    %7 = tpu.matmul %5, %6, %cst_5 {dimension_numbers = #tpu.dot_dimension_numbers<[1], [0], [0], [1], [0, 0, 1, 1], [], []>} : vector<2x384xf32>, vector<384x128xf32>, vector<2x128xf32> -> vector<2x128xf32>
    %8 = vector.extract_strided_slice %7 {offsets = [0, 0], sizes = [2, 32], strides = [1, 1]} : vector<2x128xf32> to vector<2x32xf32>
    %9 = vector.extract_strided_slice %7 {offsets = [0, 32], sizes = [2, 4], strides = [1, 1]} : vector<2x128xf32> to vector<2x4xf32>
    %10 = vector.extract_strided_slice %7 {offsets = [0, 36], sizes = [2, 4], strides = [1, 1]} : vector<2x128xf32> to vector<2x4xf32>
    %11 = arith.mulf %9, %9 : vector<2x4xf32>
    %12 = arith.subf %10, %11 : vector<2x4xf32>
    %cst_6 = arith.constant 0.000000e+00 : f32
    %13 = vector.broadcast %cst_6 : f32 to vector<2x4xf32>
    %14 = arith.maximumf %12, %13 : vector<2x4xf32>
    %15 = math.sqrt %14 : vector<2x4xf32>
    %16 = arith.truncf %15 : vector<2x4xf32> to vector<2x4xbf16>
    %c0_7 = arith.constant 0 : index
    %c0_8 = arith.constant 0 : index
    %17 = vector.load %arg4[%c0_7, %c0_8] : memref<4x32xbf16, #tpu.memory_space<vmem>>, vector<4x32xbf16>
    %cst_9 = arith.constant dense<0.000000e+00> : vector<2x32xf32>
    %18 = tpu.matmul %16, %17, %cst_9 {dimension_numbers = #tpu.dot_dimension_numbers<[1], [0], [0], [1], [0, 0, 1, 1], [], []>} : vector<2x4xbf16>, vector<4x32xbf16>, vector<2x32xf32> -> vector<2x32xf32>
    %19 = arith.addf %8, %18 : vector<2x32xf32>
    %c0_10 = arith.constant 0 : index
    %c0_11 = arith.constant 0 : index
    %20 = vector.load %arg5[%c0_10, %c0_11] : memref<1x32xf32, #tpu.memory_space<vmem>>, vector<1x32xf32>
    %21 = vector.broadcast %20 : vector<1x32xf32> to vector<2x32xf32>
    %22 = arith.addf %19, %21 : vector<2x32xf32>
    %cst_12 = arith.constant 0.000000e+00 : f32
    %23 = vector.broadcast %cst_12 : f32 to vector<2x32xf32>
    %24 = arith.maximumf %22, %23 : vector<2x32xf32>
    %25 = arith.truncf %24 : vector<2x32xf32> to vector<2x32xbf16>
    %c0_13 = arith.constant 0 : index
    %c0_14 = arith.constant 0 : index
    %26 = vector.load %arg6[%c0_13, %c0_14] : memref<32x128xbf16, #tpu.memory_space<vmem>>, vector<32x128xbf16>
    %cst_15 = arith.constant dense<0.000000e+00> : vector<2x128xf32>
    %27 = tpu.matmul %25, %26, %cst_15 {dimension_numbers = #tpu.dot_dimension_numbers<[1], [0], [0], [1], [0, 0, 1, 1], [], []>} : vector<2x32xbf16>, vector<32x128xbf16>, vector<2x128xf32> -> vector<2x128xf32>
    %c0_16 = arith.constant 0 : index
    %c0_17 = arith.constant 0 : index
    %28 = vector.load %arg7[%c0_16, %c0_17] : memref<1x128xf32, #tpu.memory_space<vmem>>, vector<1x128xf32>
    %29 = vector.broadcast %28 : vector<1x128xf32> to vector<2x128xf32>
    %30 = arith.addf %27, %29 : vector<2x128xf32>
    %c0_18 = arith.constant 0 : index
    %c0_19 = arith.constant 0 : index
    %31 = vector.load %arg8[%c0_18, %c0_19] : memref<2x128xf32, #tpu.memory_space<vmem>>, vector<2x128xf32>
    tpu.vector_store %arg8[%c0_18, %c0_19], %30 {strides = array<i32>} : memref<2x128xf32, #tpu.memory_space<vmem>>, vector<2x128xf32>,
    return
  }
  func.func @transform_0(%arg0: i32) -> (i32, i32) {
    %c0_i32 = arith.constant 0 : i32
    %c0_i32_0 = arith.constant 0 : i32
    return %arg0, %c0_i32 : i32, i32
  }
  func.func @transform_1(%arg0: i32) -> (i32, i32) {
    %c0_i32 = arith.constant 0 : i32
    %c0_i32_0 = arith.constant 0 : i32
    %c0_i32_1 = arith.constant 0 : i32
    return %c0_i32, %c0_i32_0 : i32, i32
  }
  func.func @transform_2(%arg0: i32) -> (i32, i32) {
    %c0_i32 = arith.constant 0 : i32
    %c0_i32_0 = arith.constant 0 : i32
    %c0_i32_1 = arith.constant 0 : i32
    return %c0_i32, %c0_i32_0 : i32, i32
  }
  func.func @transform_3(%arg0: i32) -> (i32, i32) {
    %c0_i32 = arith.constant 0 : i32
    %c0_i32_0 = arith.constant 0 : i32
    %c0_i32_1 = arith.constant 0 : i32
    return %c0_i32, %c0_i32_0 : i32, i32
  }
  func.func @transform_4(%arg0: i32) -> (i32, i32) {
    %c0_i32 = arith.constant 0 : i32
    %c0_i32_0 = arith.constant 0 : i32
    %c0_i32_1 = arith.constant 0 : i32
    return %c0_i32, %c0_i32_0 : i32, i32
  }
  func.func @transform_5(%arg0: i32) -> (i32, i32) {
    %c0_i32 = arith.constant 0 : i32
    %c0_i32_0 = arith.constant 0 : i32
    %c0_i32_1 = arith.constant 0 : i32
    return %c0_i32, %c0_i32_0 : i32, i32
  }
  func.func @transform_6(%arg0: i32) -> (i32, i32) {
    %c0_i32 = arith.constant 0 : i32
    %c0_i32_0 = arith.constant 0 : i32
    %c0_i32_1 = arith.constant 0 : i32
    return %c0_i32, %c0_i32_0 : i32, i32
  }
  func.func @transform_7(%arg0: i32) -> (i32, i32) {
    %c0_i32 = arith.constant 0 : i32
    %c0_i32_0 = arith.constant 0 : i32
    return %arg0, %c0_i32 : i32, i32
  }
}

</mosaic_0001>

<llo_original>
// kernel: tpu_custom_call.1
$region0: #{tpu_custom_call.1}
  #allocation0 [shape = 'u32[]', space=smem, size = 0x4, offset = 0x4, fixed_abs, tag = 'smem constant byte address 0x4 - core index']
  #allocation1 [shape = 'u32[144,128]{1,0:T(1,128)}', space=vmem, size = 0x12000, scoped, tag = 'internal scratch']
  %s0 = inlined_call_operand.hbm [shape: bf16[2,128], index: 0, kind: input, shape index: {}]
  %s1 = inlined_call_operand.hbm [shape: bf16[128,128], index: 1, kind: input, shape index: {}]
  %s2 = inlined_call_operand.hbm [shape: f32[384,128], index: 2, kind: input, shape index: {}]
  %s3 = inlined_call_operand.vmem [shape: bf16[4,32], index: 3, kind: input, shape index: {}]
  %s4 = inlined_call_operand.hbm [shape: f32[1,32], index: 4, kind: input, shape index: {}]
  %s5 = inlined_call_operand.vmem [shape: bf16[32,128], index: 5, kind: input, shape index: {}]
  %s6 = inlined_call_operand.vmem [shape: f32[1,128], index: 6, kind: input, shape index: {}]
  %s7 = inlined_call_operand.hbm [shape: f32[2,128], index: 7, kind: output, shape index: {}]
  %s8 = sld [smem:[#allocation0]]
  $region54: #{tpu_custom_call.1} parent=0
    _
  %s10 = ssub.s32 1, %s8
  %s11 = scalar_select 0, %s10, %s8
  $region1: #{tpu_custom_call.1} parent=0
    #allocation2 [shape = 'u8[512]{0}', space=vmem, size = 0x400, scoped, tag = 'input window, operand 0, single buffered']
    #allocation3 [shape = 's32[1]{0}', space=sflag, size = 0x4, scoped, tag = 'scoped memory for tpu_custom_call.1']
    #allocation4 [shape = 's32[1]{0}', space=sflag, size = 0x4, scoped, tag = 'scoped memory for tpu_custom_call.1']
    #allocation5 [shape = 'u8[32768]{0}', space=vmem, size = 0x8000, scoped, tag = 'input window, operand 1, single buffered']
    #allocation6 [shape = 's32[1]{0}', space=sflag, size = 0x4, scoped, tag = 'scoped memory for tpu_custom_call.1']
    #allocation7 [shape = 'u8[196608]{0}', space=vmem, size = 0x30000, scoped, tag = 'input window, operand 2, single buffered']
    #allocation8 [shape = 'u8[512]{0}', space=vmem, size = 0x400, scoped, tag = 'input window, operand 4, single buffered']
    #allocation9 [shape = 's32[1]{0}', space=sflag, size = 0x4, scoped, tag = 'scoped memory for tpu_custom_call.1']
    #allocation10 [shape = 'u8[1024]{0}', space=vmem, size = 0x400, scoped, tag = 'output window, operand 0, single buffered']
    %12 = vsyncpa [#allocation3], 0
    %13 = vsyncpa [#allocation6], 0
    %14 = vsyncpa [#allocation9], 0
    %15 = vsyncpa [#allocation4], 0
    // Predicated region
    $region2: #{tpu_custom_call.1} parent=1 // pred_check
      _
    $region3: #{tpu_custom_call.1} parent=1 // pred_check_branch
      %17 = sbr.rel (0) target = $region5
    $region4: #{tpu_custom_call.1} parent=1 // pred_region
      %s19 = ssub.s32 16, 16
      %20 = vsyncadd [#allocation3], %s19
      %s22 = sshll.u32 [#allocation2], 4
      %s23 = int_to_ptr.vmem [resolvable:$true] %s22
      %25 = dma.hbm_to_vmem [thread:$0]  %s0, 16, %s23, [#allocation3]
    $region5: #{tpu_custom_call.1} parent=1 // pred_fallthru
      _
    // Predicated region
    $region6: #{tpu_custom_call.1} parent=1 // pred_check
      _
    $region7: #{tpu_custom_call.1} parent=1 // pred_check_branch
      %27 = sbr.rel (0) target = $region9
    $region8: #{tpu_custom_call.1} parent=1 // pred_region
      %s29 = ssub.s32 1024, 1024
      %30 = vsyncadd [#allocation6], %s29
      %s31 = sshll.u32 [#allocation5], 4
      %s32 = int_to_ptr.vmem [resolvable:$true] %s31
      %37 = dma.hbm_to_vmem [thread:$0]  %s1, 1024, %s32, [#allocation6], 64, 64, 4
    $region9: #{tpu_custom_call.1} parent=1 // pred_fallthru
      _
    // Predicated region
    $region10: #{tpu_custom_call.1} parent=1 // pred_check
      _
    $region11: #{tpu_custom_call.1} parent=1 // pred_check_branch
      %39 = sbr.rel (0) target = $region13
    $region12: #{tpu_custom_call.1} parent=1 // pred_region
      %s41 = ssub.s32 6144, 6144
      %42 = vsyncadd [#allocation6], %s41
      %s43 = sshll.u32 [#allocation7], 4
      %s44 = int_to_ptr.vmem [resolvable:$true] %s43
      %49 = dma.hbm_to_vmem [thread:$0]  %s2, 6144, %s44, [#allocation6], 128, 128, 8
    $region13: #{tpu_custom_call.1} parent=1 // pred_fallthru
      _
    // Predicated region
    $region14: #{tpu_custom_call.1} parent=1 // pred_check
      _
    $region15: #{tpu_custom_call.1} parent=1 // pred_check_branch
      %51 = sbr.rel (0) target = $region17
    $region16: #{tpu_custom_call.1} parent=1 // pred_region
      _
    $region17: #{tpu_custom_call.1} parent=1 // pred_fallthru
      _
    // Predicated region
    $region18: #{tpu_custom_call.1} parent=1 // pred_check
      _
    $region19: #{tpu_custom_call.1} parent=1 // pred_check_branch
      %53 = sbr.rel (0) target = $region21
    $region20: #{tpu_custom_call.1} parent=1 // pred_region
      %s55 = ssub.s32 16, 16
      %56 = vsyncadd [#allocation9], %s55
      %s58 = sshll.u32 [#allocation8], 4
      %s59 = int_to_ptr.vmem [resolvable:$true] %s58
      %61 = dma.hbm_to_vmem [thread:$0]  %s4, 16, %s59, [#allocation9]
    $region21: #{tpu_custom_call.1} parent=1 // pred_fallthru
      _
    // Predicated region
    $region22: #{tpu_custom_call.1} parent=1 // pred_check
      _
    $region23: #{tpu_custom_call.1} parent=1 // pred_check_branch
      %63 = sbr.rel (0) target = $region25
    $region24: #{tpu_custom_call.1} parent=1 // pred_region
      _
    $region25: #{tpu_custom_call.1} parent=1 // pred_fallthru
      _
    // Predicated region
    $region26: #{tpu_custom_call.1} parent=1 // pred_check
      _
    $region27: #{tpu_custom_call.1} parent=1 // pred_check_branch
      %65 = sbr.rel (0) target = $region29
    $region28: #{tpu_custom_call.1} parent=1 // pred_region
      _
    $region29: #{tpu_custom_call.1} parent=1 // pred_fallthru
      _
    // Predicated region
    $region30: #{tpu_custom_call.1} parent=1 // pred_check
      _
    $region31: #{tpu_custom_call.1} parent=1 // pred_check_branch
      %67 = sbr.rel (0) target = $region33
    $region32: #{tpu_custom_call.1} parent=1 // pred_region
      %68 = dma.done [#allocation3], 16
    $region33: #{tpu_custom_call.1} parent=1 // pred_fallthru
      _
    // Predicated region
    $region34: #{tpu_custom_call.1} parent=1 // pred_check
      _
    $region35: #{tpu_custom_call.1} parent=1 // pred_check_branch
      %70 = sbr.rel (0) target = $region37
    $region36: #{tpu_custom_call.1} parent=1 // pred_region
      %71 = dma.done [#allocation6], 1024
    $region37: #{tpu_custom_call.1} parent=1 // pred_fallthru
      _
    // Predicated region
    $region38: #{tpu_custom_call.1} parent=1 // pred_check
      _
    $region39: #{tpu_custom_call.1} parent=1 // pred_check_branch
      %73 = sbr.rel (0) target = $region41
    $region40: #{tpu_custom_call.1} parent=1 // pred_region
      %74 = dma.done [#allocation6], 6144
    $region41: #{tpu_custom_call.1} parent=1 // pred_fallthru
      _
    // Predicated region
    $region42: #{tpu_custom_call.1} parent=1 // pred_check
      _
    $region43: #{tpu_custom_call.1} parent=1 // pred_check_branch
      %76 = sbr.rel (0) target = $region45
    $region44: #{tpu_custom_call.1} parent=1 // pred_region
      %77 = dma.done [#allocation9], 16
    $region45: #{tpu_custom_call.1} parent=1 // pred_fallthru
      _
    %v79 = vld [vmem:[#allocation2] sm:$0x1]
    %v80 = vld [vmem:[#allocation5] sm:$0xf]
    %v81 = vld [vmem:[#allocation5 + $0x4] sm:$0xf]
    %v82 = vld [vmem:[#allocation5 + $0x8] sm:$0xf]
    %v83 = vld [vmem:[#allocation5 + $0xc] sm:$0xf]
    %v84 = vld [vmem:[#allocation5 + $0x10] sm:$0xf]
    %v85 = vld [vmem:[#allocation5 + $0x14] sm:$0xf]
    %v86 = vld [vmem:[#allocation5 + $0x18] sm:$0xf]
    %v87 = vld [vmem:[#allocation5 + $0x1c] sm:$0xf]
    %v88 = vld [vmem:[#allocation5 + $0x20] sm:$0xf]
    %v89 = vld [vmem:[#allocation5 + $0x24] sm:$0xf]
    %v90 = vld [vmem:[#allocation5 + $0x28] sm:$0xf]
    %v91 = vld [vmem:[#allocation5 + $0x2c] sm:$0xf]
    %v92 = vld [vmem:[#allocation5 + $0x30] sm:$0xf]
    %v93 = vld [vmem:[#allocation5 + $0x34] sm:$0xf]
    %v94 = vld [vmem:[#allocation5 + $0x38] sm:$0xf]
    %v95 = vld [vmem:[#allocation5 + $0x3c] sm:$0xf]
    %v112 = vunpack.c.l.b16 %v80
    %v113 = vunpack.c.l.b16 %v81
    %v114 = vunpack.c.l.b16 %v82
    %v115 = vunpack.c.l.b16 %v83
    %v116 = vunpack.c.l.b16 %v84
    %v117 = vunpack.c.l.b16 %v85
    %v118 = vunpack.c.l.b16 %v86
    %v119 = vunpack.c.l.b16 %v87
    %v120 = vunpack.c.l.b16 %v88
    %v121 = vunpack.c.l.b16 %v89
    %v122 = vunpack.c.l.b16 %v90
    %v123 = vunpack.c.l.b16 %v91
    %v124 = vunpack.c.l.b16 %v92
    %v125 = vunpack.c.l.b16 %v93
    %v126 = vunpack.c.l.b16 %v94
    %v127 = vunpack.c.l.b16 %v95
    %v128 = vpack.c.b16 %v113, %v112
    %v129 = vpack.c.b16 %v115, %v114
    %v130 = vpack.c.b16 %v117, %v116
    %v131 = vpack.c.b16 %v119, %v118
    %v132 = vpack.c.b16 %v121, %v120
    %v133 = vpack.c.b16 %v123, %v122
    %v134 = vpack.c.b16 %v125, %v124
    %v135 = vpack.c.b16 %v127, %v126
    %144 = vmatprep.subr.bf16.mxu0 0
    %145 = vmatpush1.bf16.msra.mxu0 %v128
    %146 = vmatprep.subr.bf16.mxu0 0
    %147 = vmatpush1.bf16.msra.mxu0 %v129
    %148 = vmatprep.subr.bf16.mxu0 0
    %149 = vmatpush1.bf16.msra.mxu0 %v130
    %150 = vmatprep.subr.bf16.mxu0 0
    %151 = vmatpush1.bf16.msra.mxu0 %v131
    %152 = vmatprep.subr.bf16.mxu0 0
    %153 = vmatpush1.bf16.msra.mxu0 %v132
    %154 = vmatprep.subr.bf16.mxu0 0
    %155 = vmatpush1.bf16.msra.mxu0 %v133
    %156 = vmatprep.subr.bf16.mxu0 0
    %157 = vmatpush1.bf16.msra.mxu0 %v134
    %158 = vmatprep.subr.bf16.mxu0 0
    %159 = vmatpush1.bf16.msra.mxu0 %v135
    %160 = vmatprep.subr.bf16.mxu0 0
    %161 = vmatpush1.bf16.msra.mxu0 0
    %162 = vmatprep.subr.bf16.mxu0 0
    %163 = vmatpush1.bf16.msra.mxu0 0
    %164 = vmatprep.subr.bf16.mxu0 0
    %165 = vmatpush1.bf16.msra.mxu0 0
    %166 = vmatprep.subr.bf16.mxu0 0
    %167 = vmatpush1.bf16.msra.mxu0 0
    %168 = vmatprep.subr.bf16.mxu0 0
    %169 = vmatpush1.bf16.msra.mxu0 0
    %170 = vmatprep.subr.bf16.mxu0 0
    %171 = vmatpush1.bf16.msra.mxu0 0
    %172 = vmatprep.subr.bf16.mxu0 0
    %173 = vmatpush1.bf16.msra.mxu0 0
    %174 = vmatprep.subr.bf16.mxu0 0
    %175 = vmatpush1.bf16.msra.mxu0 0
    %176 = vmatprep.mubr.bf16.mxu0 0
    %177 = vmatmul.mubr.bf16.gmra.mrb[0].mxu0 %v79
    %v178 = vpop.f32.mrb[0].mxu0
    %v179 = vadd.f32 0.0, %v178
    %v180 = vpop.f32.mrb[0].mxu0
    %v181 = vpop.f32.mrb[0].mxu0
    %v182 = vpop.f32.mrb[0].mxu0
    %183 = vdwg.mxu0
    %v184 = vand.u32 2147483647, %v179
    %v185 = vmul.f32 %v179, %v179
    %v186 = vld [vmem:[#allocation7] sm:$0xff]
    %v187 = vld [vmem:[#allocation7 + $0x8] sm:$0xff]
    %v188 = vld [vmem:[#allocation7 + $0x10] sm:$0xff]
    %v189 = vld [vmem:[#allocation7 + $0x18] sm:$0xff]
    %v190 = vld [vmem:[#allocation7 + $0x20] sm:$0xff]
    %v191 = vld [vmem:[#allocation7 + $0x28] sm:$0xff]
    %v192 = vld [vmem:[#allocation7 + $0x30] sm:$0xff]
    %v193 = vld [vmem:[#allocation7 + $0x38] sm:$0xff]
    %v194 = vld [vmem:[#allocation7 + $0x40] sm:$0xff]
    %v195 = vld [vmem:[#allocation7 + $0x48] sm:$0xff]
    %v196 = vld [vmem:[#allocation7 + $0x50] sm:$0xff]
    %v197 = vld [vmem:[#allocation7 + $0x58] sm:$0xff]
    %v198 = vld [vmem:[#allocation7 + $0x60] sm:$0xff]
    %v199 = vld [vmem:[#allocation7 + $0x68] sm:$0xff]
    %v200 = vld [vmem:[#allocation7 + $0x70] sm:$0xff]
    %v201 = vld [vmem:[#allocation7 + $0x78] sm:$0xff]
    %v202 = vld [vmem:[#allocation7 + $0x80] sm:$0xff]
    %v203 = vld [vmem:[#allocation7 + $0x88] sm:$0xff]
    %v204 = vld [vmem:[#allocation7 + $0x90] sm:$0xff]
    %v205 = vld [vmem:[#allocation7 + $0x98] sm:$0xff]
    %v206 = vld [vmem:[#allocation7 + $0xa0] sm:$0xff]
    %v207 = vld [vmem:[#allocation7 + $0xa8] sm:$0xff]
    %v208 = vld [vmem:[#allocation7 + $0xb0] sm:$0xff]
    %v209 = vld [vmem:[#allocation7 + $0xb8] sm:$0xff]
    %v210 = vld [vmem:[#allocation7 + $0xc0] sm:$0xff]
    %v211 = vld [vmem:[#allocation7 + $0xc8] sm:$0xff]
    %v212 = vld [vmem:[#allocation7 + $0xd0] sm:$0xff]
    %v213 = vld [vmem:[#allocation7 + $0xd8] sm:$0xff]
    %v214 = vld [vmem:[#allocation7 + $0xe0] sm:$0xff]
    %v215 = vld [vmem:[#allocation7 + $0xe8] sm:$0xff]
    %v216 = vld [vmem:[#allocation7 + $0xf0] sm:$0xff]
    %v217 = vld [vmem:[#allocation7 + $0xf8] sm:$0xff]
    %v218 = vld [vmem:[#allocation7 + $0x100] sm:$0xff]
    %v219 = vld [vmem:[#allocation7 + $0x108] sm:$0xff]
    %v220 = vld [vmem:[#allocation7 + $0x110] sm:$0xff]
    %v221 = vld [vmem:[#allocation7 + $0x118] sm:$0xff]
    %v222 = vld [vmem:[#allocation7 + $0x120] sm:$0xff]
    %v223 = vld [vmem:[#allocation7 + $0x128] sm:$0xff]
    %v224 = vld [vmem:[#allocation7 + $0x130] sm:$0xff]
    %v225 = vld [vmem:[#allocation7 + $0x138] sm:$0xff]
    %v226 = vld [vmem:[#allocation7 + $0x140] sm:$0xff]
    %v227 = vld [vmem:[#allocation7 + $0x148] sm:$0xff]
    %v228 = vld [vmem:[#allocation7 + $0x150] sm:$0xff]
    %v229 = vld [vmem:[#allocation7 + $0x158] sm:$0xff]
    %v230 = vld [vmem:[#allocation7 + $0x160] sm:$0xff]
    %v231 = vld [vmem:[#allocation7 + $0x168] sm:$0xff]
    %v232 = vld [vmem:[#allocation7 + $0x170] sm:$0xff]
    %v233 = vld [vmem:[#allocation7 + $0x178] sm:$0xff]
    %234 = vmatprep.subr.mxu0 0.0
    %235 = vmatpush1.msra.mxu0 %v186
    %236 = vmatprep.subr.mxu0 0.0
    %237 = vmatpush1.msra.mxu0 %v187
    %238 = vmatprep.subr.mxu0 0.0
    %239 = vmatpush1.msra.mxu0 %v188
    %240 = vmatprep.subr.mxu0 0.0
    %241 = vmatpush1.msra.mxu0 %v189
    %242 = vmatprep.subr.mxu0 0.0
    %243 = vmatpush1.msra.mxu0 %v190
    %244 = vmatprep.subr.mxu0 0.0
    %245 = vmatpush1.msra.mxu0 %v191
    %246 = vmatprep.subr.mxu0 0.0
    %247 = vmatpush1.msra.mxu0 %v192
    %248 = vmatprep.subr.mxu0 0.0
    %249 = vmatpush1.msra.mxu0 %v193
    %250 = vmatprep.subr.mxu0 0.0
    %251 = vmatpush1.msra.mxu0 %v194
    %252 = vmatprep.subr.mxu0 0.0
    %253 = vmatpush1.msra.mxu0 %v195
    %254 = vmatprep.subr.mxu0 0.0
    %255 = vmatpush1.msra.mxu0 %v196
    %256 = vmatprep.subr.mxu0 0.0
    %257 = vmatpush1.msra.mxu0 %v197
    %258 = vmatprep.subr.mxu0 0.0
    %259 = vmatpush1.msra.mxu0 %v198
    %260 = vmatprep.subr.mxu0 0.0
    %261 = vmatpush1.msra.mxu0 %v199
    %262 = vmatprep.subr.mxu0 0.0
    %263 = vmatpush1.msra.mxu0 %v200
    %264 = vmatprep.subr.mxu0 0.0
    %265 = vmatpush1.msra.mxu0 %v201
    %266 = vmatprep.subr.mxu0 0.0
    %267 = vmatpush1.msra.mxu0 %v202
    %268 = vmatprep.subr.mxu0 0.0
    %269 = vmatpush1.msra.mxu0 %v203
    %270 = vmatprep.subr.mxu0 0.0
    %271 = vmatpush1.msra.mxu0 %v204
    %272 = vmatprep.subr.mxu0 0.0
    %273 = vmatpush1.msra.mxu0 %v205
    %274 = vmatprep.subr.mxu0 0.0
    %275 = vmatpush1.msra.mxu0 %v206
    %276 = vmatprep.subr.mxu0 0.0
    %277 = vmatpush1.msra.mxu0 %v207
    %278 = vmatprep.subr.mxu0 0.0
    %279 = vmatpush1.msra.mxu0 %v208
    %280 = vmatprep.subr.mxu0 0.0
    %281 = vmatpush1.msra.mxu0 %v209
    %282 = vmatprep.subr.mxu0 0.0
    %283 = vmatpush1.msra.mxu0 %v210
    %284 = vmatprep.subr.mxu0 0.0
    %285 = vmatpush1.msra.mxu0 %v211
    %286 = vmatprep.subr.mxu0 0.0
    %287 = vmatpush1.msra.mxu0 %v212
    %288 = vmatprep.subr.mxu0 0.0
    %289 = vmatpush1.msra.mxu0 %v213
    %290 = vmatprep.subr.mxu0 0.0
    %291 = vmatpush1.msra.mxu0 %v214
    %292 = vmatprep.subr.mxu0 0.0
    %293 = vmatpush1.msra.mxu0 %v215
    %294 = vmatprep.subr.mxu0 0.0
    %295 = vmatpush1.msra.mxu0 %v216
    %296 = vmatprep.subr.mxu0 0.0
    %297 = vmatpush1.msra.mxu0 %v217
    %298 = vmatprep.mubr.f32.mxu0 %v179
    %299 = vmatmul.mubr.f32.gmra.mrb[0].mxu0 %v184
    %v300 = vpop.f32.mrb[0].mxu0
    %v301 = vadd.f32 0.0, %v300
    %v302 = vpop.f32.mrb[0].mxu0
    %303 = vdwg.mxu0
    %304 = vmatprep.subr.mxu0 0.0
    %305 = vmatpush1.msra.mxu0 %v218
    %306 = vmatprep.subr.mxu0 0.0
    %307 = vmatpush1.msra.mxu0 %v219
    %308 = vmatprep.subr.mxu0 0.0
    %309 = vmatpush1.msra.mxu0 %v220
    %310 = vmatprep.subr.mxu0 0.0
    %311 = vmatpush1.msra.mxu0 %v221
    %312 = vmatprep.subr.mxu0 0.0
    %313 = vmatpush1.msra.mxu0 %v222
    %314 = vmatprep.subr.mxu0 0.0
    %315 = vmatpush1.msra.mxu0 %v223
    %316 = vmatprep.subr.mxu0 0.0
    %317 = vmatpush1.msra.mxu0 %v224
    %318 = vmatprep.subr.mxu0 0.0
    %319 = vmatpush1.msra.mxu0 %v225
    %320 = vmatprep.subr.mxu0 0.0
    %321 = vmatpush1.msra.mxu0 %v226
    %322 = vmatprep.subr.mxu0 0.0
    %323 = vmatpush1.msra.mxu0 %v227
    %324 = vmatprep.subr.mxu0 0.0
    %325 = vmatpush1.msra.mxu0 %v228
    %326 = vmatprep.subr.mxu0 0.0
    %327 = vmatpush1.msra.mxu0 %v229
    %328 = vmatprep.subr.mxu0 0.0
    %329 = vmatpush1.msra.mxu0 %v230
    %330 = vmatprep.subr.mxu0 0.0
    %331 = vmatpush1.msra.mxu0 %v231
    %332 = vmatprep.subr.mxu0 0.0
    %333 = vmatpush1.msra.mxu0 %v232
    %334 = vmatprep.subr.mxu0 0.0
    %335 = vmatpush1.msra.mxu0 %v233
    %336 = vmatprep.subr.mxu0 0.0
    %337 = vmatpush1.msra.mxu0 0.0
    %338 = vmatprep.subr.mxu0 0.0
    %339 = vmatpush1.msra.mxu0 0.0
    %340 = vmatprep.subr.mxu0 0.0
    %341 = vmatpush1.msra.mxu0 0.0
    %342 = vmatprep.subr.mxu0 0.0
    %343 = vmatpush1.msra.mxu0 0.0
    %344 = vmatprep.subr.mxu0 0.0
    %345 = vmatpush1.msra.mxu0 0.0
    %346 = vmatprep.subr.mxu0 0.0
    %347 = vmatpush1.msra.mxu0 0.0
    %348 = vmatprep.subr.mxu0 0.0
    %349 = vmatpush1.msra.mxu0 0.0
    %350 = vmatprep.subr.mxu0 0.0
    %351 = vmatpush1.msra.mxu0 0.0
    %352 = vmatprep.subr.mxu0 0.0
    %353 = vmatpush1.msra.mxu0 0.0
    %354 = vmatprep.subr.mxu0 0.0
    %355 = vmatpush1.msra.mxu0 0.0
    %356 = vmatprep.subr.mxu0 0.0
    %357 = vmatpush1.msra.mxu0 0.0
    %358 = vmatprep.subr.mxu0 0.0
    %359 = vmatpush1.msra.mxu0 0.0
    %360 = vmatprep.subr.mxu0 0.0
    %361 = vmatpush1.msra.mxu0 0.0
    %362 = vmatprep.subr.mxu0 0.0
    %363 = vmatpush1.msra.mxu0 0.0
    %364 = vmatprep.subr.mxu0 0.0
    %365 = vmatpush1.msra.mxu0 0.0
    %366 = vmatprep.subr.mxu0 0.0
    %367 = vmatpush1.msra.mxu0 0.0
    %368 = vmatprep.mubr.f32.mxu0 0.0
    %369 = vmatmul.mubr.f32.gmra.mrb[0].mxu0 %v185
    %v370 = vpop.f32.mrb[0].mxu0
    %v371 = vadd.f32 %v301, %v370
    %v372 = vpop.f32.mrb[0].mxu0
    %373 = vdwg.mxu0
    %v374 = vmul.f32 %v371, %v371
    %376 = vrot.lane.b32.xlu0 %v374, 4
    %v377 = vpop.permute.xlu0 %376
    %v379 = vsub.f32 %v371, %v377
    %v380 = vmax.f32 %v379, 0.0
    %v381 = vrsqrt.pop %v380
    %v382 = vmul.f32 %v380, %v381
    %vm383 = vcmp.eq.f32.partialorder %v380, inf
    %v384 = vsel %vm383, %v380, %v382
    %vm385 = vcmp.eq.f32.partialorder %v380, 0.0
    %v386 = vand.u32 %v380, 2147483648
    %v387 = vsel %vm385, %v386, %v384
    %v388 = vpack.c.bf16 %v387, %v387
    %v389 = vld [vmem:[%s3] sm:$0x3]
    %391 = vrot.lane.b32.xlu0 %v388, 92
    %v392 = vpop.permute.xlu0 %391
    %vm393 = vcmask 31744
    %v395 = vsel %vm393, %v392, 0
    %vm397 = vcmask 1041408
    %v399 = vsel %vm397, %v389, 0
    %401 = vmatprep.subr.bf16.mxu0 0
    %402 = vmatpush1.bf16.msra.mxu0 %v399
    %403 = vmatprep.subr.bf16.mxu0 0
    %404 = vmatpush1.bf16.msra.mxu0 0
    %405 = vmatprep.subr.bf16.mxu0 0
    %406 = vmatpush1.bf16.msra.mxu0 0
    %407 = vmatprep.subr.bf16.mxu0 0
    %408 = vmatpush1.bf16.msra.mxu0 0
    %409 = vmatprep.subr.bf16.mxu0 0
    %410 = vmatpush1.bf16.msra.mxu0 0
    %411 = vmatprep.subr.bf16.mxu0 0
    %412 = vmatpush1.bf16.msra.mxu0 0
    %413 = vmatprep.subr.bf16.mxu0 0
    %414 = vmatpush1.bf16.msra.mxu0 0
    %415 = vmatprep.subr.bf16.mxu0 0
    %416 = vmatpush1.bf16.msra.mxu0 0
    %417 = vmatprep.subr.bf16.mxu0 0
    %418 = vmatpush1.bf16.msra.mxu0 0
    %419 = vmatprep.subr.bf16.mxu0 0
    %420 = vmatpush1.bf16.msra.mxu0 0
    %421 = vmatprep.subr.bf16.mxu0 0
    %422 = vmatpush1.bf16.msra.mxu0 0
    %423 = vmatprep.subr.bf16.mxu0 0
    %424 = vmatpush1.bf16.msra.mxu0 0
    %425 = vmatprep.subr.bf16.mxu0 0
    %426 = vmatpush1.bf16.msra.mxu0 0
    %427 = vmatprep.subr.bf16.mxu0 0
    %428 = vmatpush1.bf16.msra.mxu0 0
    %429 = vmatprep.subr.bf16.mxu0 0
    %430 = vmatpush1.bf16.msra.mxu0 0
    %431 = vmatprep.subr.bf16.mxu0 0
    %432 = vmatpush1.bf16.msra.mxu0 0
    %433 = vmatprep.mubr.bf16.mxu0 0
    %434 = vmatmul.mubr.bf16.gmra.mrb[0].mxu0 %v395
    %v435 = vpop.f32.mrb[0].mxu0
    %v436 = vadd.f32 0.0, %v435
    %v437 = vpop.f32.mrb[0].mxu0
    %v438 = vpop.f32.mrb[0].mxu0
    %v439 = vpop.f32.mrb[0].mxu0
    %440 = vdwg.mxu0
    %v441 = vadd.f32 %v371, %v436
    %v442 = vld [vmem:[#allocation8] sm:$0x1]
    %v444 = vlaneseq
    %v445 = vshrl.u32 %v444, 7
    %v446 = vsub.s32 0, %v445
    %v447 = vrot.slane %v442, %v446
    %v449 = vadd.f32 %v441, %v447
    %v450 = vmax.f32 %v449, 0.0
    %v451 = vpack.c.bf16 %v450, %v450
    %v452 = vld [vmem:[%s5] sm:$0xf]
    %v453 = vld [vmem:[%s5 + $0x4] sm:$0xf]
    %v454 = vld [vmem:[%s5 + $0x8] sm:$0xf]
    %v455 = vld [vmem:[%s5 + $0xc] sm:$0xf]
    %v456 = vld [vmem:[%s6] sm:$0x1]
    %v458 = vlaneseq
    %v459 = vshrl.u32 %v458, 7
    %v460 = vsub.s32 0, %v459
    %v461 = vrot.slane %v456, %v460
    %v467 = vunpack.c.l.b16 %v452
    %v468 = vunpack.c.l.b16 %v453
    %v469 = vunpack.c.l.b16 %v454
    %v470 = vunpack.c.l.b16 %v455
    %v471 = vpack.c.b16 %v468, %v467
    %v472 = vpack.c.b16 %v470, %v469
    %vm475 = vcmask 261120
    %v477 = vsel %vm475, %v451, 0
    %479 = vmatprep.subr.bf16.mxu0 0
    %480 = vmatpush1.bf16.msra.mxu0 %v471
    %481 = vmatprep.subr.bf16.mxu0 0
    %482 = vmatpush1.bf16.msra.mxu0 %v472
    %483 = vmatprep.subr.bf16.mxu0 0
    %484 = vmatpush1.bf16.msra.mxu0 0
    %485 = vmatprep.subr.bf16.mxu0 0
    %486 = vmatpush1.bf16.msra.mxu0 0
    %487 = vmatprep.subr.bf16.mxu0 0
    %488 = vmatpush1.bf16.msra.mxu0 0
    %489 = vmatprep.subr.bf16.mxu0 0
    %490 = vmatpush1.bf16.msra.mxu0 0
    %491 = vmatprep.subr.bf16.mxu0 0
    %492 = vmatpush1.bf16.msra.mxu0 0
    %493 = vmatprep.subr.bf16.mxu0 0
    %494 = vmatpush1.bf16.msra.mxu0 0
    %495 = vmatprep.subr.bf16.mxu0 0
    %496 = vmatpush1.bf16.msra.mxu0 0
    %497 = vmatprep.subr.bf16.mxu0 0
    %498 = vmatpush1.bf16.msra.mxu0 0
    %499 = vmatprep.subr.bf16.mxu0 0
    %500 = vmatpush1.bf16.msra.mxu0 0
    %501 = vmatprep.subr.bf16.mxu0 0
    %502 = vmatpush1.bf16.msra.mxu0 0
    %503 = vmatprep.subr.bf16.mxu0 0
    %504 = vmatpush1.bf16.msra.mxu0 0
    %505 = vmatprep.subr.bf16.mxu0 0
    %506 = vmatpush1.bf16.msra.mxu0 0
    %507 = vmatprep.subr.bf16.mxu0 0
    %508 = vmatpush1.bf16.msra.mxu0 0
    %509 = vmatprep.subr.bf16.mxu0 0
    %510 = vmatpush1.bf16.msra.mxu0 0
    %511 = vmatprep.mubr.bf16.mxu0 0
    %512 = vmatmul.mubr.bf16.gmra.mrb[0].mxu0 %v477
    %v513 = vpop.f32.mrb[0].mxu0
    %v514 = vadd.f32 %v461, %v513
    %v515 = vpop.f32.mrb[0].mxu0
    %v516 = vpop.f32.mrb[0].mxu0
    %v517 = vpop.f32.mrb[0].mxu0
    %518 = vdwg.mxu0
    %519 = vst [vmem:[#allocation10] sm:$0x3] %v514
    // Predicated region
    $region46: #{tpu_custom_call.1} parent=1 // pred_check
      _
    $region47: #{tpu_custom_call.1} parent=1 // pred_check_branch
      %521 = sbr.rel (0) target = $region49
    $region48: #{tpu_custom_call.1} parent=1 // pred_region
      %s523 = ssub.s32 32, 32
      %524 = vsyncadd [#allocation4], %s523
      %s526 = sshll.u32 [#allocation10], 4
      %s527 = int_to_ptr.vmem [resolvable:$true] %s526
      %529 = dma.vmem_to_hbm [thread:$0]  %s527, 32, %s7, [#allocation4]
    $region49: #{tpu_custom_call.1} parent=1 // pred_fallthru
      _
    // Predicated region
    $region50: #{tpu_custom_call.1} parent=1 // pred_check
      _
    $region51: #{tpu_custom_call.1} parent=1 // pred_check_branch
      %531 = sbr.rel (0) target = $region53
    $region52: #{tpu_custom_call.1} parent=1 // pred_region
      %532 = dma.done [#allocation4], 32
    $region53: #{tpu_custom_call.1} parent=1 // pred_fallthru
      _
    %533 = vsyncpa [#allocation3], 1
    %534 = vsyncpa [#allocation6], 1
    %535 = vsyncpa [#allocation9], 1
    %536 = vsyncpa [#allocation4], 1

</llo_original>
